<compile_context>
chip_gen: v6e
topology: v6e:2x2x1
jax: 0.10.0
libtpu: 0.0.40
codegen_flags: <defaults>
</compile_context>

<pallas_src>
import jax
import jax.numpy as jnp
from jax.experimental import pallas as pl
from jax.experimental.pallas import tpu as pltpu

# Class weights baked from BackEndLoss: torch.tensor([0.1, 0.9])
_W0 = 0.1
_W1 = 0.9


def _backend_loss_kernel(packed_ref, out_ref):
    """Weighted CE vs one-hot(label) == the KLDiv formulation in the module.

    packed_ref : (B, 3) f32 VMEM   columns = [logit_class0, logit_class1, label]
    out_ref    : (1, 1) f32 SMEM   scalar loss

    NOTE: labels are assumed to lie in {0, 1}; any other value is treated as
    class 1 (weight 0.9). (The PyTorch one_hot reference would instead
    contribute 0 to both numerator and denominator for out-of-range labels.)
    """
    col0 = packed_ref[:, 0:1]                      # (B, 1) logit for class 0
    col1 = packed_ref[:, 1:2]                      # (B, 1) logit for class 1
    lab = packed_ref[:, 2:3]                       # (B, 1) label as f32 ({0.,1.})

    # Two-class log-sum-exp with only 2 transcendentals (one exp + one log);
    # log1p(exp(-d)) would be marginally better numerically but log(1+x) is
    # exact to well within the 1e-5 tolerance here (x in (0, 1]).
    m = jnp.maximum(col0, col1)
    d = jnp.abs(col0 - col1)
    lse = m + jnp.log(1.0 + jnp.exp(-d))

    is0 = lab == 0.0
    picked = jnp.where(is0, col0, col1)            # z_{i, label_i}
    w = jnp.where(is0, _W0, _W1)                   # w[label_i], already f32

    # loss = sum_i w_i * (lse_i - z_i) / sum_i w_i
    # Single fused reduction: stack [w*ce, w] and do ONE cross-sublane sum.
    ce = lse - picked                              # -log softmax[label]
    pair = jnp.concatenate([w * ce, w], axis=1)    # (B, 2)
    sums = jnp.sum(pair, axis=0, keepdims=True)    # (1, 2) = [num, den]
    out_ref[0, 0] = sums[0, 0] / sums[0, 1]


def backend_loss(cm_logits, llr_tarspf, asv_logits, llr_tarnon,
                 sasv_score, label_cm, label_asv):
    """Matches BackEndLoss.forward: only cm_logits / label_cm are used."""
    del llr_tarspf, asv_logits, llr_tarnon, sasv_score, label_asv  # unused

    B = cm_logits.shape[0]
    C = cm_logits.shape[-1]
    assert C == 2, "BackEndLoss class weight [0.1, 0.9] implies C == 2"

    # Pack logits + label into ONE f32 array -> one DMA, one tiny XLA fusion.
    logits = jnp.squeeze(cm_logits, axis=1)
    if logits.dtype != jnp.float32:
        logits = logits.astype(jnp.float32)
    labels_f32 = label_cm.reshape(B, 1).astype(jnp.float32)   # {0,1} exact in f32
    packed = jnp.concatenate([logits, labels_f32], axis=1)    # (B, 3)

    loss = pl.pallas_call(
        _backend_loss_kernel,
        out_shape=jax.ShapeDtypeStruct((1, 1), jnp.float32),
        in_specs=[pl.BlockSpec(memory_space=pltpu.MemorySpace.VMEM)],
        out_specs=pl.BlockSpec(memory_space=pltpu.MemorySpace.SMEM),
    )(packed)
    return loss[0, 0]


def _reference_loss(cm_logits, label_cm):
    """Pure-JAX transliteration of LogSoftmaxWrapperWeighted/BackEndLoss."""
    outputs = jnp.squeeze(cm_logits, axis=1).astype(jnp.float32)
    labels = jnp.squeeze(label_cm, axis=1).astype(jnp.int32)
    t = jax.nn.one_hot(labels, outputs.shape[1], dtype=jnp.float32)
    logp = jax.nn.log_softmax(outputs, axis=1)
    # KLDivLoss(reduction='none'): t * (log t - logp); xlogy(0,0) = 0
    loss_mat = jnp.where(t > 0, t * jnp.log(jnp.where(t > 0, t, 1.0)), 0.0) - t * logp
    weight = jnp.array([0.1, 0.9], dtype=jnp.float32)
    wmat = t * weight
    return jnp.sum(loss_mat * wmat) / jnp.sum(wmat)


if __name__ == "__main__":
    key = jax.random.PRNGKey(0)
    k1, k2, k3, k4, k5, k6, k7 = jax.random.split(key, 7)

    B, C = 8, 2
    cm_logits = jax.random.normal(k1, (B, 1, C), dtype=jnp.float32)
    llr_tarspf = jax.random.normal(k2, (B,), dtype=jnp.float32)
    asv_logits = jax.random.normal(k3, (B, 1, C), dtype=jnp.float32)
    llr_tarnon = jax.random.normal(k4, (B,), dtype=jnp.float32)
    sasv_score = jax.random.normal(k5, (B,), dtype=jnp.float32)
    label_cm = jax.random.randint(k6, (B, 1), 0, C, dtype=jnp.int32)
    label_asv = jax.random.randint(k7, (B, 1), 0, C, dtype=jnp.int32)

    loss = backend_loss(cm_logits, llr_tarspf, asv_logits, llr_tarnon,
                        sasv_score, label_cm, label_asv)
    jax.block_until_ready(loss)

    ref = _reference_loss(cm_logits, label_cm)
    assert jnp.allclose(loss, ref, rtol=1e-5, atol=1e-5), (loss, ref)

    print("KERNEL_OK")
</pallas_src>

<mosaic_0001>
module attributes {stable_mosaic.version = 11 : i64} {
  func.func @_backend_loss_kernel(%arg0: memref<8x3xf32, #tpu.memory_space<vmem>>, %arg1: memref<1x1xf32, #tpu.memory_space<smem>>) attributes {dimension_semantics = [], scalar_prefetch = 0 : i64, scratch_operands = 0 : i64, tpu.core_type = #tpu.core_type<tc>} {
    %c0 = arith.constant 0 : index
    %c0_0 = arith.constant 0 : index
    %0 = vector.load %arg0[%c0, %c0_0] : memref<8x3xf32, #tpu.memory_space<vmem>>, vector<8x1xf32>
    %c0_1 = arith.constant 0 : index
    %c1 = arith.constant 1 : index
    %1 = vector.load %arg0[%c0_1, %c1] : memref<8x3xf32, #tpu.memory_space<vmem>>, vector<8x1xf32>
    %c0_2 = arith.constant 0 : index
    %c2 = arith.constant 2 : index
    %2 = vector.load %arg0[%c0_2, %c2] : memref<8x3xf32, #tpu.memory_space<vmem>>, vector<8x1xf32>
    %3 = arith.maximumf %0, %1 : vector<8x1xf32>
    %4 = arith.subf %0, %1 : vector<8x1xf32>
    %5 = math.absf %4 : vector<8x1xf32>
    %cst = arith.constant 0.000000e+00 : f32
    %6 = vector.broadcast %cst : f32 to vector<8x1xf32>
    %7 = arith.subf %6, %5 : vector<8x1xf32>
    %8 = math.exp %7 : vector<8x1xf32>
    %cst_3 = arith.constant 1.000000e+00 : f32
    %9 = vector.broadcast %cst_3 : f32 to vector<8x1xf32>
    %10 = arith.addf %9, %8 : vector<8x1xf32>
    %11 = math.log %10 : vector<8x1xf32>
    %12 = arith.addf %3, %11 : vector<8x1xf32>
    %cst_4 = arith.constant 0.000000e+00 : f32
    %13 = vector.broadcast %cst_4 : f32 to vector<8x1xf32>
    %14 = arith.cmpf oeq, %2, %13 : vector<8x1xf32>
    %15 = arith.select %14, %0, %1 : vector<8x1xi1>, vector<8x1xf32>
    %cst_5 = arith.constant 1.000000e-01 : f32
    %cst_6 = arith.constant 0.899999976 : f32
    %16 = vector.broadcast %cst_5 : f32 to vector<8x1xf32>
    %17 = vector.broadcast %cst_6 : f32 to vector<8x1xf32>
    %18 = arith.select %14, %16, %17 : vector<8x1xi1>, vector<8x1xf32>
    %19 = arith.subf %12, %15 : vector<8x1xf32>
    %20 = arith.mulf %18, %19 : vector<8x1xf32>
    %21 = tpu.concatenate %20, %18 in 1 : vector<8x1xf32>, vector<8x1xf32> -> vector<8x2xf32>
    %cst_7 = arith.constant dense<0.000000e+00> : vector<2xf32>
    %22 = vector.multi_reduction <add>, %21, %cst_7 [0] : vector<8x2xf32> to vector<2xf32>
    %23 = vector.shape_cast %22 : vector<2xf32> to vector<1x2xf32>
    %24 = vector.extract_strided_slice %23 {offsets = [0, 0], sizes = [1, 1], strides = [1, 1]} : vector<1x2xf32> to vector<1x1xf32>
    %25 = vector.extract %24[0, 0] : f32 from vector<1x1xf32>
    %26 = vector.extract_strided_slice %23 {offsets = [0, 1], sizes = [1, 1], strides = [1, 1]} : vector<1x2xf32> to vector<1x1xf32>
    %27 = vector.extract %26[0, 0] : f32 from vector<1x1xf32>
    %28 = arith.divf %25, %27 : f32
    %c0_8 = arith.constant 0 : index
    %c0_9 = arith.constant 0 : index
    %29 = memref.load %arg1[%c0_8, %c0_9] : memref<1x1xf32, #tpu.memory_space<smem>>
    memref.store %28, %arg1[%c0_8, %c0_9] : memref<1x1xf32, #tpu.memory_space<smem>>
    return
  }
}

</mosaic_0001>

<llo_original>
// kernel: tpu_custom_call.1
$region0: #{tpu_custom_call.1}
  #allocation0 [shape = 'u32[]', space=smem, size = 0x4, offset = 0x4, fixed_abs, tag = 'smem constant byte address 0x4 - core index']
  #allocation1 [shape = 'u32[144,128]{1,0:T(1,128)}', space=vmem, size = 0x12000, scoped, tag = 'internal scratch']
  %s0 = inlined_call_operand.vmem [shape: f32[8,3], index: 0, kind: input, shape index: {}]
  %s1 = inlined_call_operand.hbm [shape: f32[1,1], index: 1, kind: output, shape index: {}]
  %s2 = sld [smem:[#allocation0]]
  $region14: #{tpu_custom_call.1} parent=0
    _
  %s4 = ssub.s32 1, %s2
  %s5 = scalar_select 0, %s4, %s2
  $region1: #{tpu_custom_call.1} parent=0
    #allocation2 [shape = 'u8[512]{0}', space=smem, size = 0x200, scoped, tag = 'output window, operand 0, single buffered']
    #allocation3 [shape = 's32[1]{0}', space=sflag, size = 0x4, scoped, tag = 'scoped memory for tpu_custom_call.1']
    %6 = vsyncpa [#allocation3], 0
    // Predicated region
    $region2: #{tpu_custom_call.1} parent=1 // pred_check
      _
    $region3: #{tpu_custom_call.1} parent=1 // pred_check_branch
      %8 = sbr.rel (0) target = $region5
    $region4: #{tpu_custom_call.1} parent=1 // pred_region
      _
    $region5: #{tpu_custom_call.1} parent=1 // pred_fallthru
      _
    %v9 = vld [vmem:[%s0] sm:$0xff]
    %11 = vrot.lane.b32.xlu0 %v9, 127
    %v12 = vpop.permute.xlu0 %11
    %v14 = vmax.f32 %v9, %v12
    %v15 = vsub.f32 %v9, %v12
    %v16 = vand.u32 2147483647, %v15
    %v17 = vsub.f32 0.0, %v16
    %v18 = vmul.f32 %v17, 1.442695
    %v19 = vpow.pop %v18
    %v20 = vadd.f32 %v19, 1.0
    %v21 = vlog2.pop %v20
    %v22 = vmul.f32 %v21, 0.6931472
    %v23 = vadd.f32 %v14, %v22
    %vm24 = vcmp.eq.f32.partialorder %v9, 0.0
    %25 = vrot.lane.b32.xlu0 %v9, 2
    %v26 = vpop.permute.xlu0 %25
    %28 = vrot.lane.b32.xlu0 %v9, 1
    %v29 = vpop.permute.xlu0 %28
    %v31 = vsel %vm24, %v26, %v29
    %v32 = vsel %vm24, 0.1, 0.9
    %34 = vrot.lane.b32.xlu0 %v31, 126
    %v35 = vpop.permute.xlu0 %34
    %v37 = vsub.f32 %v23, %v35
    %39 = vrot.lane.b32.xlu0 %v37, 2
    %v40 = vpop.permute.xlu0 %39
    %v42 = vmul.f32 %v32, %v40
    %44 = vrot.lane.b32.xlu0 %v42, 126
    %v45 = vpop.permute.xlu0 %44
    %48 = vrot.lane.b32.xlu0 %v32, 127
    %v49 = vpop.permute.xlu0 %48
    %vm51 = vcmask 7168
    %v52 = vsel %vm51, %v45, %v49
    %vm53 = vcmask 15360
    %v54 = vsel %vm53, %v52, 0.0
    %v55 = vrot.slane %v54, 4
    %v56 = vadd.f32 %v54, %v55
    %v57 = vrot.slane %v56, 2
    %v58 = vadd.f32 %v56, %v57
    %v59 = vrot.slane %v58, 1
    %v60 = vadd.f32 %v58, %v59
    %s61 = vtos %v60
    %62 = vrot.lane.b32.xlu0 %v60, 127
    %v63 = vpop.permute.xlu0 %62
    %s64 = vtos %v63
    %v65 = vstv %s64
    %v66 = vrcp.pop %v65
    %s67 = vtos %v66
    %s68 = smul.f32 %s61, %s67
    %s69 = scalar_lea.smem [#allocation2], 0
    %70 = sst [smem:[%s69]] %s68
    // Predicated region
    $region6: #{tpu_custom_call.1} parent=1 // pred_check
      _
    $region7: #{tpu_custom_call.1} parent=1 // pred_check_branch
      %72 = sbr.rel (0) target = $region9
    $region8: #{tpu_custom_call.1} parent=1 // pred_region
      %s74 = ssub.s32 16, 16
      %75 = vsyncadd [#allocation3], %s74
      %78 = dma.smem_to_hbm [#allocation2], 16, %s1, [#allocation3]
    $region9: #{tpu_custom_call.1} parent=1 // pred_fallthru
      _
    // Predicated region
    $region10: #{tpu_custom_call.1} parent=1 // pred_check
      _
    $region11: #{tpu_custom_call.1} parent=1 // pred_check_branch
      %80 = sbr.rel (0) target = $region13
    $region12: #{tpu_custom_call.1} parent=1 // pred_region
      %81 = dma.done [#allocation3], 16
    $region13: #{tpu_custom_call.1} parent=1 // pred_fallthru
      _
    %82 = sfence
    %83 = vsyncpa [#allocation3], 1

</llo_original>
